<compile_context>
chip_gen: v5e
topology: v5e:2x2
jax: 0.10.0
libtpu: 0.0.40
codegen_flags: <defaults>
</compile_context>

<pallas_src>
import jax
import jax.numpy as jnp
from jax.experimental import pallas as pl
from jax.experimental.pallas import tpu as pltpu


def _round_up(n, m):
    return ((n + m - 1) // m) * m


def mlp_kernel(x_ref, w1_ref, b1_ref, w2_ref, b2_ref, o_ref):
    # fc1 on the MXU: cast x to bf16 in-kernel (hidden under DMA), f32 accum.
    x_bf = x_ref[...].astype(jnp.bfloat16)
    h = jnp.dot(x_bf, w1_ref[...], preferred_element_type=jnp.float32)
    # Bias + ReLU in f32 on the VPU (v5e has no bf16 VALU).
    h = jnp.maximum(h + b1_ref[...], 0.0)
    # fc2 on the MXU: downcast activations only for the matmul operands.
    y = jnp.dot(h.astype(jnp.bfloat16), w2_ref[...],
                preferred_element_type=jnp.float32)
    o_ref[...] = (y + b2_ref[...]).astype(o_ref.dtype)


def prepare_params(w1, b1, w2, b2):
    """One-time parameter prep (do NOT call per forward).

    w1: [I, H], b1: [1, H], w2: [H, O], b2: [1, O]  (transposed vs. PyTorch
    nn.Linear storage).  Pads H and O to multiples of 128 and casts the
    weight matrices to bf16 for the MXU; biases stay f32 for the f32 epilogue.
    """
    I, H = w1.shape
    O = w2.shape[1]
    H_pad = _round_up(H, 128)
    O_pad = _round_up(O, 128)

    if H_pad != H:
        w1 = jnp.pad(w1, ((0, 0), (0, H_pad - H)))
        b1 = jnp.pad(b1, ((0, 0), (0, H_pad - H)))
        w2 = jnp.pad(w2, ((0, H_pad - H), (0, 0)))
    if O_pad != O:
        w2 = jnp.pad(w2, ((0, 0), (0, O_pad - O)))
        b2 = jnp.pad(b2, ((0, 0), (0, O_pad - O)))

    return {
        "w1": w1.astype(jnp.bfloat16),   # [I, H_pad]
        "b1": b1.astype(jnp.float32),    # [1, H_pad]
        "w2": w2.astype(jnp.bfloat16),   # [H_pad, O_pad]
        "b2": b2.astype(jnp.float32),    # [1, O_pad]
        "out_features": O,
    }


def mlp_forward(x, params, *, batch_tile=512):
    """Forward pass of fc2(relu(fc1(x))) using pre-prepared params.

    x: [B, I] f32.  Returns [B, out_features] f32.
    """
    B, I = x.shape
    w1, b1, w2, b2 = params["w1"], params["b1"], params["w2"], params["b2"]
    O = params["out_features"]
    H_pad = w1.shape[1]
    O_pad = w2.shape[1]

    # bf16 activations pack 16 rows / vreg; pad the batch accordingly.
    B_pad = _round_up(B, 16)

    if B_pad >= batch_tile:
        # ---- Tiled, pipelined, megacore-parallel path for large batches ----
        B_pad = _round_up(B, batch_tile)
        x_p = x if B_pad == B else jnp.pad(x, ((0, B_pad - B), (0, 0)))
        const = lambda i: (0, 0)
        out_p = pl.pallas_call(
            mlp_kernel,
            out_shape=jax.ShapeDtypeStruct((B_pad, O_pad), jnp.float32),
            grid_spec=pl.GridSpec(
                grid=(B_pad // batch_tile,),
                in_specs=[
                    pl.BlockSpec((batch_tile, I), lambda i: (i, 0)),
                    # VMEM-resident weights/biases: constant index_map +
                    # single buffering (no pointless double-buffer copy).
                    pl.BlockSpec((I, H_pad), const,
                                 pipeline_mode=pl.Buffered(1)),
                    pl.BlockSpec((1, H_pad), const,
                                 pipeline_mode=pl.Buffered(1)),
                    pl.BlockSpec((H_pad, O_pad), const,
                                 pipeline_mode=pl.Buffered(1)),
                    pl.BlockSpec((1, O_pad), const,
                                 pipeline_mode=pl.Buffered(1)),
                ],
                out_specs=pl.BlockSpec((batch_tile, O_pad), lambda i: (i, 0)),
            ),
            compiler_params=pltpu.CompilerParams(
                dimension_semantics=("parallel",),
                # Above the 16/32 MiB scoped defaults, within v7x's 64 MiB.
                vmem_limit_bytes=64 * 1024 * 1024,
            ),
        )(x_p, w1, b1, w2, b2)
    else:
        # ---- Small batch: single invocation, no grid / pipeline machinery ----
        x_p = x if B_pad == B else jnp.pad(x, ((0, B_pad - B), (0, 0)))
        vmem_spec = pl.BlockSpec(memory_space=pltpu.MemorySpace.VMEM)
        out_p = pl.pallas_call(
            mlp_kernel,
            out_shape=jax.ShapeDtypeStruct((B_pad, O_pad), jnp.float32),
            in_specs=[vmem_spec] * 5,
            out_specs=vmem_spec,
        )(x_p, w1, b1, w2, b2)

    if B_pad == B and O_pad == O:
        return out_p
    return out_p[:B, :O]


def init_params(key, input_size, hidden_size, output_size):
    # Deterministic init mimicking nn.Linear's uniform(-1/sqrt(fan_in), ...).
    k1, k2, k3, k4 = jax.random.split(key, 4)
    lim1 = 1.0 / jnp.sqrt(jnp.float32(input_size))
    lim2 = 1.0 / jnp.sqrt(jnp.float32(hidden_size))
    w1 = jax.random.uniform(k1, (input_size, hidden_size), jnp.float32, -lim1, lim1)
    b1 = jax.random.uniform(k2, (1, hidden_size), jnp.float32, -lim1, lim1)
    w2 = jax.random.uniform(k3, (hidden_size, output_size), jnp.float32, -lim2, lim2)
    b2 = jax.random.uniform(k4, (1, output_size), jnp.float32, -lim2, lim2)
    return w1, b1, w2, b2


if __name__ == "__main__":
    batch = 8
    input_size = 32
    hidden_size = 64
    output_size = 16

    key = jax.random.PRNGKey(0)
    kx, kp = jax.random.split(key)
    x = jax.random.normal(kx, (batch, input_size), jnp.float32)
    w1, b1, w2, b2 = init_params(kp, input_size, hidden_size, output_size)

    # One-time parameter prep (padding + bf16 cast), then the cheap forward.
    params = prepare_params(w1, b1, w2, b2)
    out = mlp_forward(x, params)
    jax.block_until_ready(out)

    # Reference in plain f32 JAX (same math as the PyTorch forward). The
    # kernel uses bf16 MXU operands with f32 accumulation, so tolerances are
    # loosened to cover the bf16 rounding.
    ref = jnp.maximum(x @ w1 + b1, 0.0) @ w2 + b2
    assert out.shape == (batch, output_size)
    assert jnp.allclose(out, ref, atol=2e-2, rtol=2e-2), (
        float(jnp.max(jnp.abs(out - ref))))

    print("KERNEL_OK")
</pallas_src>

<mosaic_0001>
module attributes {stable_mosaic.version = 11 : i64} {
  func.func @mlp_kernel(%arg0: memref<16x32xf32, #tpu.memory_space<vmem>>, %arg1: memref<32x128xbf16, #tpu.memory_space<vmem>>, %arg2: memref<1x128xf32, #tpu.memory_space<vmem>>, %arg3: memref<128x128xbf16, #tpu.memory_space<vmem>>, %arg4: memref<1x128xf32, #tpu.memory_space<vmem>>, %arg5: memref<16x128xf32, #tpu.memory_space<vmem>>) attributes {dimension_semantics = [], scalar_prefetch = 0 : i64, scratch_operands = 0 : i64, tpu.core_type = #tpu.core_type<tc>} {
    %c0 = arith.constant 0 : index
    %c0_0 = arith.constant 0 : index
    %0 = vector.load %arg0[%c0, %c0_0] : memref<16x32xf32, #tpu.memory_space<vmem>>, vector<16x32xf32>
    %1 = arith.truncf %0 : vector<16x32xf32> to vector<16x32xbf16>
    %c0_1 = arith.constant 0 : index
    %c0_2 = arith.constant 0 : index
    %2 = vector.load %arg1[%c0_1, %c0_2] : memref<32x128xbf16, #tpu.memory_space<vmem>>, vector<32x128xbf16>
    %cst = arith.constant dense<0.000000e+00> : vector<16x128xf32>
    %3 = tpu.matmul %1, %2, %cst {dimension_numbers = #tpu.dot_dimension_numbers<[1], [0], [0], [1], [0, 0, 1, 1], [], []>} : vector<16x32xbf16>, vector<32x128xbf16>, vector<16x128xf32> -> vector<16x128xf32>
    %c0_3 = arith.constant 0 : index
    %c0_4 = arith.constant 0 : index
    %4 = vector.load %arg2[%c0_3, %c0_4] : memref<1x128xf32, #tpu.memory_space<vmem>>, vector<1x128xf32>
    %5 = vector.broadcast %4 : vector<1x128xf32> to vector<16x128xf32>
    %6 = arith.addf %3, %5 : vector<16x128xf32>
    %cst_5 = arith.constant 0.000000e+00 : f32
    %7 = vector.broadcast %cst_5 : f32 to vector<16x128xf32>
    %8 = arith.maximumf %6, %7 : vector<16x128xf32>
    %9 = arith.truncf %8 : vector<16x128xf32> to vector<16x128xbf16>
    %c0_6 = arith.constant 0 : index
    %c0_7 = arith.constant 0 : index
    %10 = vector.load %arg3[%c0_6, %c0_7] : memref<128x128xbf16, #tpu.memory_space<vmem>>, vector<128x128xbf16>
    %cst_8 = arith.constant dense<0.000000e+00> : vector<16x128xf32>
    %11 = tpu.matmul %9, %10, %cst_8 {dimension_numbers = #tpu.dot_dimension_numbers<[1], [0], [0], [1], [0, 0, 1, 1], [], []>} : vector<16x128xbf16>, vector<128x128xbf16>, vector<16x128xf32> -> vector<16x128xf32>
    %c0_9 = arith.constant 0 : index
    %c0_10 = arith.constant 0 : index
    %12 = vector.load %arg4[%c0_9, %c0_10] : memref<1x128xf32, #tpu.memory_space<vmem>>, vector<1x128xf32>
    %13 = vector.broadcast %12 : vector<1x128xf32> to vector<16x128xf32>
    %14 = arith.addf %11, %13 : vector<16x128xf32>
    %c0_11 = arith.constant 0 : index
    %c0_12 = arith.constant 0 : index
    %15 = vector.load %arg5[%c0_11, %c0_12] : memref<16x128xf32, #tpu.memory_space<vmem>>, vector<16x128xf32>
    tpu.vector_store %arg5[%c0_11, %c0_12], %14 {strides = array<i32>} : memref<16x128xf32, #tpu.memory_space<vmem>>, vector<16x128xf32>,
    return
  }
}

</mosaic_0001>

<llo_original>
// kernel: tpu_custom_call.1
$region0: #{tpu_custom_call.1}
  #allocation0 [shape = 'u32[]', space=smem, size = 0x4, offset = 0x4, fixed_abs, tag = 'smem constant byte address 0x4 - core index']
  #allocation1 [shape = 'u32[72,128]{1,0:T(1,128)}', space=vmem, size = 0x9000, scoped, tag = 'internal scratch']
  %s0 = inlined_call_operand.hbm [shape: f32[16,32], index: 0, kind: input, shape index: {}]
  %s1 = inlined_call_operand.hbm [shape: bf16[32,128], index: 1, kind: input, shape index: {}]
  %s2 = inlined_call_operand.vmem [shape: f32[1,128], index: 2, kind: input, shape index: {}]
  %s3 = inlined_call_operand.hbm [shape: bf16[128,128], index: 3, kind: input, shape index: {}]
  %s4 = inlined_call_operand.vmem [shape: f32[1,128], index: 4, kind: input, shape index: {}]
  %s5 = inlined_call_operand.hbm [shape: f32[16,128], index: 5, kind: output, shape index: {}]
  %s6 = sld [smem:[#allocation0]]
  $region42: #{tpu_custom_call.1} parent=0
    _
  %s8 = ssub.s32 1, %s6
  %s9 = scalar_select 0, %s8, %s6
  $region1: #{tpu_custom_call.1} parent=0
    #allocation2 [shape = 'u8[8192]{0}', space=vmem, size = 0x2000, scoped, tag = 'input window, operand 0, single buffered']
    #allocation3 [shape = 's32[1]{0}', space=sflag, size = 0x4, scoped, tag = 'scoped memory for tpu_custom_call.1']
    #allocation4 [shape = 's32[1]{0}', space=sflag, size = 0x4, scoped, tag = 'scoped memory for tpu_custom_call.1']
    #allocation5 [shape = 'u8[8192]{0}', space=vmem, size = 0x2000, scoped, tag = 'input window, operand 1, single buffered']
    #allocation6 [shape = 's32[1]{0}', space=sflag, size = 0x4, scoped, tag = 'scoped memory for tpu_custom_call.1']
    #allocation7 [shape = 'u8[32768]{0}', space=vmem, size = 0x8000, scoped, tag = 'input window, operand 3, single buffered']
    #allocation8 [shape = 'u8[8192]{0}', space=vmem, size = 0x2000, scoped, tag = 'output window, operand 0, single buffered']
    %10 = vsyncpa [#allocation3], 0
    %11 = vsyncpa [#allocation6], 0
    %12 = vsyncpa [#allocation4], 0
    // Predicated region
    $region2: #{tpu_custom_call.1} parent=1 // pred_check
      _
    $region3: #{tpu_custom_call.1} parent=1 // pred_check_branch
      %14 = sbr.rel (0) target = $region5
    $region4: #{tpu_custom_call.1} parent=1 // pred_region
      %16 = vsyncadd [#allocation3], 0
      %s17 = sshll.u32 %s0, 4
      %s18 = int_to_ptr.hbm [resolvable:$true] %s17
      %s19 = sshll.u32 [#allocation2], 4
      %s20 = int_to_ptr.vmem [resolvable:$true] %s19
      %25 = dma.hbm_to_vmem [thread:$0]  %s18, 256, %s20, [#allocation3], 128, 128, 8
    $region5: #{tpu_custom_call.1} parent=1 // pred_fallthru
      _
    // Predicated region
    $region6: #{tpu_custom_call.1} parent=1 // pred_check
      _
    $region7: #{tpu_custom_call.1} parent=1 // pred_check_branch
      %27 = sbr.rel (0) target = $region9
    $region8: #{tpu_custom_call.1} parent=1 // pred_region
      %29 = vsyncadd [#allocation6], 0
      %s30 = sshll.u32 %s1, 4
      %s31 = int_to_ptr.hbm [resolvable:$true] %s30
      %s32 = sshll.u32 [#allocation5], 4
      %s33 = int_to_ptr.vmem [resolvable:$true] %s32
      %38 = dma.hbm_to_vmem [thread:$0]  %s31, 256, %s33, [#allocation6], 64, 64, 4
    $region9: #{tpu_custom_call.1} parent=1 // pred_fallthru
      _
    // Predicated region
    $region10: #{tpu_custom_call.1} parent=1 // pred_check
      _
    $region11: #{tpu_custom_call.1} parent=1 // pred_check_branch
      %40 = sbr.rel (0) target = $region13
    $region12: #{tpu_custom_call.1} parent=1 // pred_region
      _
    $region13: #{tpu_custom_call.1} parent=1 // pred_fallthru
      _
    // Predicated region
    $region14: #{tpu_custom_call.1} parent=1 // pred_check
      _
    $region15: #{tpu_custom_call.1} parent=1 // pred_check_branch
      %42 = sbr.rel (0) target = $region17
    $region16: #{tpu_custom_call.1} parent=1 // pred_region
      %44 = vsyncadd [#allocation6], 0
      %s45 = sshll.u32 %s3, 4
      %s46 = int_to_ptr.hbm [resolvable:$true] %s45
      %s47 = sshll.u32 [#allocation7], 4
      %s48 = int_to_ptr.vmem [resolvable:$true] %s47
      %53 = dma.hbm_to_vmem [thread:$0]  %s46, 1024, %s48, [#allocation6], 64, 64, 4
    $region17: #{tpu_custom_call.1} parent=1 // pred_fallthru
      _
    // Predicated region
    $region18: #{tpu_custom_call.1} parent=1 // pred_check
      _
    $region19: #{tpu_custom_call.1} parent=1 // pred_check_branch
      %55 = sbr.rel (0) target = $region21
    $region20: #{tpu_custom_call.1} parent=1 // pred_region
      _
    $region21: #{tpu_custom_call.1} parent=1 // pred_fallthru
      _
    // Predicated region
    $region22: #{tpu_custom_call.1} parent=1 // pred_check
      _
    $region23: #{tpu_custom_call.1} parent=1 // pred_check_branch
      %57 = sbr.rel (0) target = $region25
    $region24: #{tpu_custom_call.1} parent=1 // pred_region
      %59 = dma.done [#allocation3], 256
    $region25: #{tpu_custom_call.1} parent=1 // pred_fallthru
      _
    // Predicated region
    $region26: #{tpu_custom_call.1} parent=1 // pred_check
      _
    $region27: #{tpu_custom_call.1} parent=1 // pred_check_branch
      %61 = sbr.rel (0) target = $region29
    $region28: #{tpu_custom_call.1} parent=1 // pred_region
      %63 = dma.done [#allocation6], 256
    $region29: #{tpu_custom_call.1} parent=1 // pred_fallthru
      _
    // Predicated region
    $region30: #{tpu_custom_call.1} parent=1 // pred_check
      _
    $region31: #{tpu_custom_call.1} parent=1 // pred_check_branch
      %65 = sbr.rel (0) target = $region33
    $region32: #{tpu_custom_call.1} parent=1 // pred_region
      %67 = dma.done [#allocation6], 1024
    $region33: #{tpu_custom_call.1} parent=1 // pred_fallthru
      _
    %v69 = vld [vmem:[#allocation2] sm:$0xff]
    %v70 = vld [vmem:[#allocation2 + $0x8] sm:$0xff]
    %v71 = vpack.c.bf16 %v70, %v69
    %v72 = vld [vmem:[#allocation5] sm:$0xf]
    %v73 = vld [vmem:[#allocation5 + $0x4] sm:$0xf]
    %v74 = vld [vmem:[#allocation5 + $0x8] sm:$0xf]
    %v75 = vld [vmem:[#allocation5 + $0xc] sm:$0xf]
    %v76 = vld [vmem:[%s2] sm:$0x1]
    %v78 = vperm.slane %v76, 0
    %v84 = vunpack.c.l.b16 %v72
    %v85 = vunpack.c.l.b16 %v73
    %v86 = vunpack.c.l.b16 %v74
    %v87 = vunpack.c.l.b16 %v75
    %v88 = vpack.c.b16 %v85, %v84
    %v89 = vpack.c.b16 %v87, %v86
    %vm92 = vcmask 261120
    %v94 = vsel %vm92, %v71, 0
    %96 = vmatpush.bf16.msra.mxu0 0
    %97 = vmatpush.bf16.msra.mxu0 0
    %98 = vmatpush.bf16.msra.mxu0 0
    %99 = vmatpush.bf16.msra.mxu0 0
    %100 = vmatpush.bf16.msra.mxu0 0
    %101 = vmatpush.bf16.msra.mxu0 0
    %102 = vmatpush.bf16.msra.mxu0 %v89
    %103 = vmatpush.bf16.msra.mxu0 %v88
    %104 = vmatmul.bf16.gmra.mxu0 %v94
    %v105 = vpop.f32.mrf.mxu0
    %v106 = vadd.f32 %v78, %v105
    %v107 = vpop.f32.mrf.mxu0
    %v108 = vadd.f32 %v78, %v107
    %109 = vdwg.mxu0
    %v110 = vmax.f32 %v106, 0.0
    %v111 = vmax.f32 %v108, 0.0
    %v112 = vpack.c.bf16 %v111, %v110
    %v113 = vld [vmem:[#allocation7] sm:$0xf]
    %v114 = vld [vmem:[#allocation7 + $0x4] sm:$0xf]
    %v115 = vld [vmem:[#allocation7 + $0x8] sm:$0xf]
    %v116 = vld [vmem:[#allocation7 + $0xc] sm:$0xf]
    %v117 = vld [vmem:[#allocation7 + $0x10] sm:$0xf]
    %v118 = vld [vmem:[#allocation7 + $0x14] sm:$0xf]
    %v119 = vld [vmem:[#allocation7 + $0x18] sm:$0xf]
    %v120 = vld [vmem:[#allocation7 + $0x1c] sm:$0xf]
    %v121 = vld [vmem:[#allocation7 + $0x20] sm:$0xf]
    %v122 = vld [vmem:[#allocation7 + $0x24] sm:$0xf]
    %v123 = vld [vmem:[#allocation7 + $0x28] sm:$0xf]
    %v124 = vld [vmem:[#allocation7 + $0x2c] sm:$0xf]
    %v125 = vld [vmem:[#allocation7 + $0x30] sm:$0xf]
    %v126 = vld [vmem:[#allocation7 + $0x34] sm:$0xf]
    %v127 = vld [vmem:[#allocation7 + $0x38] sm:$0xf]
    %v128 = vld [vmem:[#allocation7 + $0x3c] sm:$0xf]
    %v129 = vld [vmem:[%s4] sm:$0x1]
    %v131 = vperm.slane %v129, 0
    %v149 = vunpack.c.l.b16 %v113
    %v150 = vunpack.c.l.b16 %v114
    %v151 = vunpack.c.l.b16 %v115
    %v152 = vunpack.c.l.b16 %v116
    %v153 = vunpack.c.l.b16 %v117
    %v154 = vunpack.c.l.b16 %v118
    %v155 = vunpack.c.l.b16 %v119
    %v156 = vunpack.c.l.b16 %v120
    %v157 = vunpack.c.l.b16 %v121
    %v158 = vunpack.c.l.b16 %v122
    %v159 = vunpack.c.l.b16 %v123
    %v160 = vunpack.c.l.b16 %v124
    %v161 = vunpack.c.l.b16 %v125
    %v162 = vunpack.c.l.b16 %v126
    %v163 = vunpack.c.l.b16 %v127
    %v164 = vunpack.c.l.b16 %v128
    %v165 = vpack.c.b16 %v150, %v149
    %v166 = vpack.c.b16 %v152, %v151
    %v167 = vpack.c.b16 %v154, %v153
    %v168 = vpack.c.b16 %v156, %v155
    %v169 = vpack.c.b16 %v158, %v157
    %v170 = vpack.c.b16 %v160, %v159
    %v171 = vpack.c.b16 %v162, %v161
    %v172 = vpack.c.b16 %v164, %v163
    %181 = vmatpush.bf16.msra.mxu0 %v172
    %182 = vmatpush.bf16.msra.mxu0 %v171
    %183 = vmatpush.bf16.msra.mxu0 %v170
    %184 = vmatpush.bf16.msra.mxu0 %v169
    %185 = vmatpush.bf16.msra.mxu0 %v168
    %186 = vmatpush.bf16.msra.mxu0 %v167
    %187 = vmatpush.bf16.msra.mxu0 %v166
    %188 = vmatpush.bf16.msra.mxu0 %v165
    %189 = vmatmul.bf16.gmra.mxu0 %v112
    %v190 = vpop.f32.mrf.mxu0
    %v191 = vadd.f32 %v131, %v190
    %v192 = vpop.f32.mrf.mxu0
    %v193 = vadd.f32 %v131, %v192
    %194 = vdwg.mxu0
    %195 = vst [vmem:[#allocation8] sm:$0xff] %v191
    %196 = vst [vmem:[#allocation8 + $0x8] sm:$0xff] %v193
    // Predicated region
    $region34: #{tpu_custom_call.1} parent=1 // pred_check
      _
    $region35: #{tpu_custom_call.1} parent=1 // pred_check_branch
      %198 = sbr.rel (0) target = $region37
    $region36: #{tpu_custom_call.1} parent=1 // pred_region
      %200 = vsyncadd [#allocation4], 0
      %s201 = sshll.u32 [#allocation8], 4
      %s202 = int_to_ptr.vmem [resolvable:$true] %s201
      %s203 = sshll.u32 %s5, 4
      %s204 = int_to_ptr.hbm [resolvable:$true] %s203
      %209 = dma.vmem_to_hbm [thread:$0]  %s202, 256, %s204, [#allocation4], 128, 128, 8
    $region37: #{tpu_custom_call.1} parent=1 // pred_fallthru
      _
    // Predicated region
    $region38: #{tpu_custom_call.1} parent=1 // pred_check
      _
    $region39: #{tpu_custom_call.1} parent=1 // pred_check_branch
      %211 = sbr.rel (0) target = $region41
    $region40: #{tpu_custom_call.1} parent=1 // pred_region
      %213 = dma.done [#allocation4], 256
    $region41: #{tpu_custom_call.1} parent=1 // pred_fallthru
      _
    %214 = vsyncpa [#allocation3], 1
    %215 = vsyncpa [#allocation6], 1
    %216 = vsyncpa [#allocation4], 1

</llo_original>
